<compile_context>
chip_gen: v5e
topology: v5e:2x2
jax: 0.10.0
libtpu: 0.0.40
codegen_flags: <defaults>
</compile_context>

<pallas_src>
import jax
import jax.numpy as jnp
from jax import lax
from jax.experimental import pallas as pl
from jax.experimental.pallas import tpu as pltpu

LANE = 128            # padded feature width (lane-dense outputs)
TILE = 128            # dst/src node tile (raise to 256-512 for large graphs)
NEG_SLOPE = 0.2
MASK_VAL = -1e30
VMEM_LIMIT = 48 * 1024 * 1024   # explicit scoped-VMEM cap (fits v7x's 64 MiB)


# ----------------------------------------------------------------------------
# Kernels
# ----------------------------------------------------------------------------
def gat_transform_kernel(x_ref, w_ref, asrc_ref, adst_ref,
                         h_ref, esrc_ref, edst_ref):
    """Per dst-row tile: h = x @ W, e_src (row vector), e_dst (column vector)."""
    h = jnp.dot(x_ref[...].astype(jnp.bfloat16), w_ref[...].astype(jnp.bfloat16),
                preferred_element_type=jnp.float32)                  # (TILE, F)
    h_ref[...] = h
    # e_dst = <h_i, a_dst>  via VPU multiply + lane reduction -> (TILE, 1)
    edst_ref[...] = jnp.sum(h * adst_ref[...], axis=-1, keepdims=True)
    # e_src as a lane-dense row vector (1, TILE): a_src (1,F) contracted with h
    esrc_ref[...] = lax.dot_general(asrc_ref[...], h, (((1,), (1,)), ((), ())),
                                    preferred_element_type=jnp.float32)


def gat_attn_kernel(occ_ref, smap_ref, edst_ref, esrc_ref, h_ref, adj_ref,
                    b_ref, o_ref, m_sc, l_sc, acc_sc):
    """Online masked softmax + aggregation for one (dst tile, src tile) step."""
    i = pl.program_id(0)
    j = pl.program_id(1)

    @pl.when(j == 0)
    def _init():
        m_sc[...] = jnp.full_like(m_sc, MASK_VAL)
        l_sc[...] = jnp.zeros_like(l_sc)
        acc_sc[...] = jnp.zeros_like(acc_sc)

    # Skip all compute for adjacency tiles with no edges (DMA is also elided
    # because the index_maps remap empty tiles to the previously loaded block).
    @pl.when(occ_ref[i, j] > 0)
    def _compute():
        mask = adj_ref[...] != 0                                     # (tq, tk)
        logits = edst_ref[...] + esrc_ref[...]                       # (tq, tk)
        logits = jnp.where(logits > 0, logits, NEG_SLOPE * logits)   # LeakyReLU
        logits = jnp.where(mask, logits, MASK_VAL)

        m_new = jnp.maximum(m_sc[...], jnp.max(logits, axis=-1, keepdims=True))
        rescale = jnp.exp(m_sc[...] - m_new)
        p = jnp.exp(logits - m_new)
        p = jnp.where(mask, p, 0.0)

        l_sc[...] = rescale * l_sc[...] + jnp.sum(p, axis=-1, keepdims=True)
        acc_sc[...] = rescale * acc_sc[...] + jnp.dot(
            p.astype(jnp.bfloat16), h_ref[...].astype(jnp.bfloat16),
            preferred_element_type=jnp.float32)
        m_sc[...] = m_new

    @pl.when(j == pl.num_programs(1) - 1)
    def _finalize():
        denom = jnp.maximum(l_sc[...], 1e-30)        # self-loops keep denom > 0
        out = acc_sc[...] * pl.reciprocal(denom, approx=True)
        out = out + b_ref[...]
        o_ref[...] = jnp.maximum(out, 0.0)           # fused ReLU from forward()


def pool_classify_kernel(onehot_ref, h_ref, wc_ref, bc_ref, o_ref):
    """global_add_pool (one-hot segment-sum matmul) + Linear classifier."""
    pooled = jnp.dot(onehot_ref[...], h_ref[...],
                     preferred_element_type=jnp.float32)             # (B, F)
    o_ref[...] = jnp.dot(pooled, wc_ref[...],
                         preferred_element_type=jnp.float32) + bc_ref[...]


# ----------------------------------------------------------------------------
# pallas_call wrappers
# ----------------------------------------------------------------------------
def _full_spec(shape):
    return pl.BlockSpec(shape, lambda: tuple(0 for _ in shape))


def gat_transform(x, w, a_src, a_dst):
    n_pad, fin_pad = x.shape
    f_pad = w.shape[1]
    grid = (n_pad // TILE,)
    return pl.pallas_call(
        gat_transform_kernel,
        grid=grid,
        in_specs=[
            pl.BlockSpec((TILE, fin_pad), lambda i: (i, 0)),
            pl.BlockSpec((fin_pad, f_pad), lambda i: (0, 0)),
            pl.BlockSpec((1, f_pad), lambda i: (0, 0)),
            pl.BlockSpec((1, f_pad), lambda i: (0, 0)),
        ],
        out_specs=[
            pl.BlockSpec((TILE, f_pad), lambda i: (i, 0)),
            pl.BlockSpec((1, TILE), lambda i: (0, i)),
            pl.BlockSpec((TILE, 1), lambda i: (i, 0)),
        ],
        out_shape=[
            jax.ShapeDtypeStruct((n_pad, f_pad), jnp.float32),
            jax.ShapeDtypeStruct((1, n_pad), jnp.float32),
            jax.ShapeDtypeStruct((n_pad, 1), jnp.float32),
        ],
        compiler_params=pltpu.CompilerParams(
            dimension_semantics=("parallel",),
            vmem_limit_bytes=VMEM_LIMIT),
    )(x, w, a_src, a_dst)


def gat_attention(occ, smap, e_dst, e_src, h, adj, bias):
    n_pad, f_pad = h.shape
    nd = n_pad // TILE
    ns = n_pad // TILE
    return pl.pallas_call(
        gat_attn_kernel,
        grid_spec=pltpu.PrefetchScalarGridSpec(
            num_scalar_prefetch=2,
            grid=(nd, ns),
            in_specs=[
                pl.BlockSpec((TILE, 1), lambda i, j, occ, sm: (i, 0)),        # e_dst
                pl.BlockSpec((1, TILE), lambda i, j, occ, sm: (0, sm[i, j])), # e_src
                pl.BlockSpec((TILE, f_pad), lambda i, j, occ, sm: (sm[i, j], 0)),  # h (src)
                pl.BlockSpec((TILE, TILE), lambda i, j, occ, sm: (i, sm[i, j])),   # adj i8
                pl.BlockSpec((1, f_pad), lambda i, j, occ, sm: (0, 0)),       # bias
            ],
            out_specs=pl.BlockSpec((TILE, f_pad), lambda i, j, occ, sm: (i, 0)),
            scratch_shapes=[
                pltpu.VMEM((TILE, 1), jnp.float32),      # running max m
                pltpu.VMEM((TILE, 1), jnp.float32),      # running denom l
                pltpu.VMEM((TILE, f_pad), jnp.float32),  # accumulator
            ],
        ),
        out_shape=jax.ShapeDtypeStruct((n_pad, f_pad), jnp.float32),
        compiler_params=pltpu.CompilerParams(
            dimension_semantics=("parallel", "arbitrary"),
            vmem_limit_bytes=VMEM_LIMIT),
    )(occ, smap, e_dst, e_src, h, adj, bias)


def pool_and_classify(onehot, h, wc, bc):
    b = onehot.shape[0]
    c = wc.shape[1]
    return pl.pallas_call(
        pool_classify_kernel,
        out_shape=jax.ShapeDtypeStruct((b, c), jnp.float32),
        in_specs=[_full_spec(onehot.shape), _full_spec(h.shape),
                  _full_spec(wc.shape), _full_spec(bc.shape)],
        out_specs=_full_spec((b, c)),
        compiler_params=pltpu.CompilerParams(vmem_limit_bytes=VMEM_LIMIT),
    )(onehot, h, wc, bc)


# ----------------------------------------------------------------------------
# Full forward
# ----------------------------------------------------------------------------
def gat_graph_forward(params, x, edge_attr, edge_index, batch, num_graphs):
    del edge_attr  # unused in the PyTorch forward as well
    n, fin = x.shape
    n_pad = max(TILE, ((n + TILE - 1) // TILE) * TILE)
    nd = n_pad // TILE

    # int8 dense adjacency adj[dst, src] with self-loops (also on padding rows
    # so every softmax row has >= 1 unmasked entry).
    src = edge_index[0]
    dst = edge_index[1]
    adj = jnp.zeros((n_pad, n_pad), jnp.int8).at[dst, src].set(1)
    adj = jnp.maximum(adj, jnp.eye(n_pad, dtype=jnp.int8))

    # Per-(dst block, src block) occupancy + source-block remap tables
    # (scalar-prefetched).  Empty blocks re-use the last occupied block index
    # so their DMA is elided; pl.when skips their compute.
    occ = (adj.astype(jnp.int32).reshape(nd, TILE, nd, TILE)
           .sum(axis=(1, 3)) > 0).astype(jnp.int32)
    col = jnp.broadcast_to(jnp.arange(nd, dtype=jnp.int32)[None, :], (nd, nd))
    marked = jnp.where(occ > 0, col, -1)
    smap = lax.cummax(marked, axis=1)
    smap = jnp.where(smap >= 0, smap, col).astype(jnp.int32)

    # Zero-pad node features to (n_pad, LANE) -- padded rows/cols stay zero.
    x_pad = jnp.zeros((n_pad, LANE), jnp.float32).at[:n, :fin].set(x)

    h = x_pad
    for layer in params["convs"]:
        hh, e_src, e_dst = gat_transform(h, layer["w"], layer["a_src"],
                                         layer["a_dst"])
        h = gat_attention(occ, smap, e_dst, e_src, hh, adj, layer["bias"])
        # dropout: identity (eval mode)

    # global_add_pool: one-hot pooling matrix; padded nodes (batch == -1) drop out.
    batch_pad = jnp.full((n_pad,), -1, jnp.int32).at[:n].set(batch)
    onehot = (batch_pad[None, :] ==
              jnp.arange(num_graphs, dtype=jnp.int32)[:, None]).astype(jnp.float32)
    return pool_and_classify(onehot, h, params["wc"], params["bc"])


# ----------------------------------------------------------------------------
# Deterministic parameter init (shapes follow the PyTorch module __init__),
# zero-padded to lane-dense widths (mathematically identical to unpadded).
# ----------------------------------------------------------------------------
def init_params(key, in_channels, hidden_channels, out_channels, num_layers,
                heads=1):
    f = hidden_channels * heads     # heads=1 -> per-head dim == concat dim
    params = {"convs": []}
    for i in range(num_layers):
        in_dim = in_channels if i == 0 else f
        key, k1, k2, k3 = jax.random.split(key, 4)
        scale = 1.0 / jnp.sqrt(jnp.float32(in_dim))
        w = jax.random.normal(k1, (in_dim, f), jnp.float32) * scale
        a_src = jax.random.normal(k2, (1, f), jnp.float32) * 0.1
        a_dst = jax.random.normal(k3, (1, f), jnp.float32) * 0.1
        params["convs"].append({
            "w": jnp.zeros((LANE, LANE), jnp.float32).at[:in_dim, :f].set(w),
            "a_src": jnp.zeros((1, LANE), jnp.float32).at[:, :f].set(a_src),
            "a_dst": jnp.zeros((1, LANE), jnp.float32).at[:, :f].set(a_dst),
            "bias": jnp.zeros((1, LANE), jnp.float32),
        })
    key, k1 = jax.random.split(key)
    wc = (jax.random.normal(k1, (f, out_channels), jnp.float32)
          / jnp.sqrt(jnp.float32(f)))
    params["wc"] = jnp.zeros((LANE, out_channels), jnp.float32).at[:f, :].set(wc)
    params["bc"] = jnp.zeros((1, out_channels), jnp.float32)
    return params


# ----------------------------------------------------------------------------
# Main
# ----------------------------------------------------------------------------
if __name__ == "__main__":
    key = jax.random.PRNGKey(0)

    # Small synthetic graph batch: 2 graphs x 80 nodes = 160 nodes (pads to
    # 256 -> a 2x2 tile grid, exercising multi-tile accumulation + tile skip).
    in_channels, hidden_channels, out_channels = 8, 16, 4
    num_layers, heads = 2, 1
    nodes_per_graph, n_graphs = 80, 2
    n_nodes = nodes_per_graph * n_graphs
    n_edges = 512

    key, kx, ke, ks, kd = jax.random.split(key, 5)
    x = jax.random.normal(kx, (n_nodes, in_channels), jnp.float32)
    edge_attr = jax.random.normal(ke, (n_edges, 4), jnp.float32)  # unused
    src = jax.random.randint(ks, (n_edges,), 0, n_nodes)
    dst = jax.random.randint(kd, (n_edges,), 0, n_nodes)
    edge_index = jnp.stack([src, dst], axis=0)                    # (2, E)
    batch = jnp.repeat(jnp.arange(n_graphs, dtype=jnp.int32), nodes_per_graph)

    params = init_params(jax.random.PRNGKey(0), in_channels, hidden_channels,
                         out_channels, num_layers, heads)

    out = gat_graph_forward(params, x, edge_attr, edge_index, batch, n_graphs)
    out = jax.block_until_ready(out)
    assert out.shape == (n_graphs, out_channels), out.shape
    assert bool(jnp.all(jnp.isfinite(out)))
    print("KERNEL_OK")
</pallas_src>

<mosaic_0001>
module attributes {stable_mosaic.version = 11 : i64} {
  func.func @gat_transform_kernel(%arg0: i32, %arg1: memref<128x128xf32, #tpu.memory_space<vmem>>, %arg2: memref<128x128xf32, #tpu.memory_space<vmem>>, %arg3: memref<1x128xf32, #tpu.memory_space<vmem>>, %arg4: memref<1x128xf32, #tpu.memory_space<vmem>>, %arg5: memref<128x128xf32, #tpu.memory_space<vmem>>, %arg6: memref<1x128xf32, #tpu.memory_space<vmem>>, %arg7: memref<128x1xf32, #tpu.memory_space<vmem>>) attributes {dimension_semantics = [#tpu.dimension_semantics<parallel>], iteration_bounds = array<i64: 2>, scalar_prefetch = 0 : i64, scratch_operands = 0 : i64, tpu.core_type = #tpu.core_type<tc>, window_params = [{transform_indices = @transform_0, window_bounds = array<i64: 128, 128>}, {pipeline_mode = #tpu.pipeline_mode<synchronous>, transform_indices = @transform_1, window_bounds = array<i64: 128, 128>}, {pipeline_mode = #tpu.pipeline_mode<synchronous>, transform_indices = @transform_2, window_bounds = array<i64: 1, 128>}, {pipeline_mode = #tpu.pipeline_mode<synchronous>, transform_indices = @transform_3, window_bounds = array<i64: 1, 128>}, {transform_indices = @transform_4, window_bounds = array<i64: 128, 128>}, {transform_indices = @transform_5, window_bounds = array<i64: 1, 128>}, {transform_indices = @transform_6, window_bounds = array<i64: 128, 1>}]} {
    %c0 = arith.constant 0 : index
    %c0_0 = arith.constant 0 : index
    %0 = vector.load %arg1[%c0, %c0_0] : memref<128x128xf32, #tpu.memory_space<vmem>>, vector<128x128xf32>
    %1 = arith.truncf %0 : vector<128x128xf32> to vector<128x128xbf16>
    %c0_1 = arith.constant 0 : index
    %c0_2 = arith.constant 0 : index
    %2 = vector.load %arg2[%c0_1, %c0_2] : memref<128x128xf32, #tpu.memory_space<vmem>>, vector<128x128xf32>
    %3 = arith.truncf %2 : vector<128x128xf32> to vector<128x128xbf16>
    %cst = arith.constant dense<0.000000e+00> : vector<128x128xf32>
    %4 = tpu.matmul %1, %3, %cst {dimension_numbers = #tpu.dot_dimension_numbers<[1], [0], [0], [1], [0, 0, 1, 1], [], []>} : vector<128x128xbf16>, vector<128x128xbf16>, vector<128x128xf32> -> vector<128x128xf32>
    %c0_3 = arith.constant 0 : index
    %c0_4 = arith.constant 0 : index
    %5 = vector.load %arg5[%c0_3, %c0_4] : memref<128x128xf32, #tpu.memory_space<vmem>>, vector<128x128xf32>
    tpu.vector_store %arg5[%c0_3, %c0_4], %4 {strides = array<i32>} : memref<128x128xf32, #tpu.memory_space<vmem>>, vector<128x128xf32>,
    %c0_5 = arith.constant 0 : index
    %c0_6 = arith.constant 0 : index
    %6 = vector.load %arg4[%c0_5, %c0_6] : memref<1x128xf32, #tpu.memory_space<vmem>>, vector<1x128xf32>
    %7 = vector.broadcast %6 : vector<1x128xf32> to vector<128x128xf32>
    %8 = arith.mulf %4, %7 : vector<128x128xf32>
    %cst_7 = arith.constant dense<0.000000e+00> : vector<128xf32>
    %9 = vector.multi_reduction <add>, %8, %cst_7 [1] : vector<128x128xf32> to vector<128xf32>
    %10 = vector.shape_cast %9 : vector<128xf32> to vector<128x1xf32>
    %c0_8 = arith.constant 0 : index
    %c0_9 = arith.constant 0 : index
    %11 = vector.load %arg7[%c0_8, %c0_9] : memref<128x1xf32, #tpu.memory_space<vmem>>, vector<128x1xf32>
    tpu.vector_store %arg7[%c0_8, %c0_9], %10 {strides = array<i32>} : memref<128x1xf32, #tpu.memory_space<vmem>>, vector<128x1xf32>,
    %c0_10 = arith.constant 0 : index
    %c0_11 = arith.constant 0 : index
    %12 = vector.load %arg3[%c0_10, %c0_11] : memref<1x128xf32, #tpu.memory_space<vmem>>, vector<1x128xf32>
    %cst_12 = arith.constant dense<0.000000e+00> : vector<1x128xf32>
    %13 = tpu.matmul %12, %4, %cst_12 {dimension_numbers = #tpu.dot_dimension_numbers<[1], [1], [0], [0], [0, 0, 1, 0], [], []>} : vector<1x128xf32>, vector<128x128xf32>, vector<1x128xf32> -> vector<1x128xf32>
    %c0_13 = arith.constant 0 : index
    %c0_14 = arith.constant 0 : index
    %14 = vector.load %arg6[%c0_13, %c0_14] : memref<1x128xf32, #tpu.memory_space<vmem>>, vector<1x128xf32>
    tpu.vector_store %arg6[%c0_13, %c0_14], %13 {strides = array<i32>} : memref<1x128xf32, #tpu.memory_space<vmem>>, vector<1x128xf32>,
    return
  }
  func.func @transform_0(%arg0: i32) -> (i32, i32) {
    %c0_i32 = arith.constant 0 : i32
    %c0_i32_0 = arith.constant 0 : i32
    return %arg0, %c0_i32 : i32, i32
  }
  func.func @transform_1(%arg0: i32) -> (i32, i32) {
    %c0_i32 = arith.constant 0 : i32
    %c0_i32_0 = arith.constant 0 : i32
    %c0_i32_1 = arith.constant 0 : i32
    return %c0_i32, %c0_i32_0 : i32, i32
  }
  func.func @transform_2(%arg0: i32) -> (i32, i32) {
    %c0_i32 = arith.constant 0 : i32
    %c0_i32_0 = arith.constant 0 : i32
    %c0_i32_1 = arith.constant 0 : i32
    return %c0_i32, %c0_i32_0 : i32, i32
  }
  func.func @transform_3(%arg0: i32) -> (i32, i32) {
    %c0_i32 = arith.constant 0 : i32
    %c0_i32_0 = arith.constant 0 : i32
    %c0_i32_1 = arith.constant 0 : i32
    return %c0_i32, %c0_i32_0 : i32, i32
  }
  func.func @transform_4(%arg0: i32) -> (i32, i32) {
    %c0_i32 = arith.constant 0 : i32
    %c0_i32_0 = arith.constant 0 : i32
    return %arg0, %c0_i32 : i32, i32
  }
  func.func @transform_5(%arg0: i32) -> (i32, i32) {
    %c0_i32 = arith.constant 0 : i32
    %c0_i32_0 = arith.constant 0 : i32
    return %c0_i32, %arg0 : i32, i32
  }
  func.func @transform_6(%arg0: i32) -> (i32, i32) {
    %c0_i32 = arith.constant 0 : i32
    %c0_i32_0 = arith.constant 0 : i32
    return %arg0, %c0_i32 : i32, i32
  }
}

</mosaic_0001>

<llo_original>
// kernel: tpu_custom_call.1
$region0: #{tpu_custom_call.1}
  #allocation0 [shape = 'u32[]', space=smem, size = 0x4, offset = 0x4, fixed_abs, tag = 'smem constant byte address 0x4 - core index']
  #allocation1 [shape = 'u32[72,128]{1,0:T(1,128)}', space=vmem, size = 0x9000, scoped, tag = 'internal scratch']
  %s0 = inlined_call_operand.hbm [shape: f32[256,128], index: 0, kind: input, shape index: {}]
  %s1 = inlined_call_operand.hbm [shape: f32[128,128], index: 1, kind: input, shape index: {}]
  %s2 = inlined_call_operand.vmem [shape: f32[1,128], index: 2, kind: input, shape index: {}]
  %s3 = inlined_call_operand.vmem [shape: f32[1,128], index: 3, kind: input, shape index: {}]
  %s4 = inlined_call_operand.hbm [shape: f32[256,128], index: 4, kind: output, shape index: {0}]
  %s5 = inlined_call_operand.hbm [shape: f32[1,256], index: 5, kind: output, shape index: {1}]
  %s6 = inlined_call_operand.vmem [shape: f32[256,1], index: 6, kind: output, shape index: {2}]
  %7 = xla_tuple %s4, %s5, %s6
  %s8 = sld [smem:[#allocation0]]
  $region73: #{tpu_custom_call.1} parent=0
    _
  %s10 = ssub.s32 1, %s8
  %s11 = scalar_select 0, %s10, %s8
  $region1: #{tpu_custom_call.1} parent=0
    #allocation2 [shape = 'u8[131072]{0}', space=vmem, size = 0x20000, scoped, tag = 'input window, operand 0']
    #allocation3 [shape = 's32[2]{0}', space=sflag, size = 0x8, scoped, tag = 'scoped memory for tpu_custom_call.1']
    #allocation4 [shape = 's32[2]{0}', space=sflag, size = 0x8, scoped, tag = 'scoped memory for tpu_custom_call.1']
    #allocation5 [shape = 'u8[65536]{0}', space=vmem, size = 0x10000, scoped, tag = 'input window, operand 1, single buffered']
    #allocation6 [shape = 's32[1]{0}', space=sflag, size = 0x4, scoped, tag = 'scoped memory for tpu_custom_call.1']
    #allocation7 [shape = 'u8[131072]{0}', space=vmem, size = 0x20000, scoped, tag = 'output window, operand 0']
    #allocation8 [shape = 'u8[1024]{0}', space=vmem, size = 0x400, scoped, tag = 'output window, operand 1']
    #allocation9 [shape = 's32[2]{0}', space=sflag, size = 0x8, scoped, tag = 'scoped memory for tpu_custom_call.1']
    %12 = vsyncpa [#allocation3], 0
    %s13 = scalar_lea.sflag [#allocation3], 1
    %14 = vsyncpa %s13, 0
    %15 = vsyncpa [#allocation6], 0
    %16 = vsyncpa [#allocation4], 0
    %s17 = scalar_lea.sflag [#allocation4], 1
    %18 = vsyncpa %s17, 0
    %19 = vsyncpa [#allocation9], 0
    %s20 = scalar_lea.sflag [#allocation9], 1
    %21 = vsyncpa %s20, 0
    loop: start=0, step=1, limit=4
    $region2: #{tpu_custom_call.1} parent=1 // loop_pre_header
      _
    $region3: #{tpu_custom_call.1} parent=1 // loop_header
      %s23 = sphi 0, %s27
      %p24 = scmp.ge.s32.totalorder %s23, 4
      %s33 = sphi 0, %s35
      %s36 = sphi 0, %s33
      %s37 = sphi 0, %s36
      %s53 = sphi 0, %s37
      %s57 = sphi 0, %s57
      %s59 = sphi 0, %s57
      %s60 = sphi 0, %s59
      %s74 = sphi 0, %s60
      %s78 = sphi 0, %s78
      %s80 = sphi 0, %s78
      %s81 = sphi 0, %s80
      %s95 = sphi 0, %s81
      %s99 = sphi 0, %s99
      %s101 = sphi 0, %s99
      %s102 = sphi 0, %s101
      %s116 = sphi 0, %s102
      %s122 = sphi 0, %s124
      %s125 = sphi 0, %s122
      %s126 = sphi 0, %s125
      %s142 = sphi 0, %s126
      %s148 = sphi 0, %s150
      %s151 = sphi 0, %s148
      %s152 = sphi 0, %s151
      %s168 = sphi 0, %s152
      %s174 = sphi 0, %s176
      %s177 = sphi 0, %s174
      %s178 = sphi 0, %s177
      %s194 = sphi 0, %s178
    $region4: #{tpu_custom_call.1} parent=1 // loop_header_branch
      %26 = sbr.rel (%p24) target = $region8
    $region5: #{tpu_custom_call.1} parent=1 // loop_body
      %s28 = ssub.s32 %s23, 1
      %s29 = ssub.s32 %s23, 2
      %s30 = sadd.s32 %s23, 1
      %s31 = ssub.s32 %s23, %s30
      %p32 = scmp.eq.s32.totalorder %s31, 0
      %s34 = sadd.s32 %s33, 1
      %s35 = scalar_select %p32, %s33, %s34
      %p38 = pneg %p32
      %p39 = scmp.eq.s32.totalorder %s23, 1
      %p40 = por %p38, %p39
      %p41 = scmp.ne.s32.totalorder %s33, %s36
      %p42 = scmp.eq.s32.totalorder %s23, 0
      %p43 = por %p41, %p42
      %p44 = scmp.ne.s32.totalorder %s33, %s36
      %p45 = scmp.eq.s32.totalorder %s28, 1
      %p46 = por %p44, %p45
      %p47 = scmp.ne.s32.totalorder %s36, %s37
      %p48 = scmp.eq.s32.totalorder %s28, 0
      %p49 = por %p47, %p48
      %p50 = scmp.ne.s32.totalorder %s36, %s37
      %p51 = scmp.eq.s32.totalorder %s29, 1
      %p52 = por %p50, %p51
      %p54 = scmp.ne.s32.totalorder %s37, %s53
      %p55 = scmp.eq.s32.totalorder %s29, 0
      %p56 = por %p54, %p55
      %s58 = sadd.s32 %s57, 1
      %p61 = scmp.eq.s32.totalorder %s23, 1
      %p62 = scmp.ne.s32.totalorder %s57, %s59
      %p63 = scmp.eq.s32.totalorder %s23, 0
      %p64 = por %p62, %p63
      %p65 = scmp.ne.s32.totalorder %s57, %s59
      %p66 = scmp.eq.s32.totalorder %s28, 1
      %p67 = por %p65, %p66
      %p68 = scmp.ne.s32.totalorder %s59, %s60
      %p69 = scmp.eq.s32.totalorder %s28, 0
      %p70 = por %p68, %p69
      %p71 = scmp.ne.s32.totalorder %s59, %s60
      %p72 = scmp.eq.s32.totalorder %s29, 1
      %p73 = por %p71, %p72
      %p75 = scmp.ne.s32.totalorder %s60, %s74
      %p76 = scmp.eq.s32.totalorder %s29, 0
      %p77 = por %p75, %p76
      %s79 = sadd.s32 %s78, 1
      %p82 = scmp.eq.s32.totalorder %s23, 1
      %p83 = scmp.ne.s32.totalorder %s78, %s80
      %p84 = scmp.eq.s32.totalorder %s23, 0
      %p85 = por %p83, %p84
      %p86 = scmp.ne.s32.totalorder %s78, %s80
      %p87 = scmp.eq.s32.totalorder %s28, 1
      %p88 = por %p86, %p87
      %p89 = scmp.ne.s32.totalorder %s80, %s81
      %p90 = scmp.eq.s32.totalorder %s28, 0
      %p91 = por %p89, %p90
      %p92 = scmp.ne.s32.totalorder %s80, %s81
      %p93 = scmp.eq.s32.totalorder %s29, 1
      %p94 = por %p92, %p93
      %p96 = scmp.ne.s32.totalorder %s81, %s95
      %p97 = scmp.eq.s32.totalorder %s29, 0
      %p98 = por %p96, %p97
      %s100 = sadd.s32 %s99, 1
      %p103 = scmp.eq.s32.totalorder %s23, 1
      %p104 = scmp.ne.s32.totalorder %s99, %s101
      %p105 = scmp.eq.s32.totalorder %s23, 0
      %p106 = por %p104, %p105
      %p107 = scmp.ne.s32.totalorder %s99, %s101
      %p108 = scmp.eq.s32.totalorder %s28, 1
      %p109 = por %p107, %p108
      %p110 = scmp.ne.s32.totalorder %s101, %s102
      %p111 = scmp.eq.s32.totalorder %s28, 0
      %p112 = por %p110, %p111
      %p113 = scmp.ne.s32.totalorder %s101, %s102
      %p114 = scmp.eq.s32.totalorder %s29, 1
      %p115 = por %p113, %p114
      %p117 = scmp.ne.s32.totalorder %s102, %s116
      %p118 = scmp.eq.s32.totalorder %s29, 0
      %p119 = por %p117, %p118
      %s120 = ssub.s32 %s23, %s30
      %p121 = scmp.eq.s32.totalorder %s120, 0
      %s123 = sadd.s32 %s122, 1
      %s124 = scalar_select %p121, %s122, %s123
      %p127 = pneg %p121
      %p128 = scmp.eq.s32.totalorder %s23, 1
      %p129 = por %p127, %p128
      %p130 = scmp.ne.s32.totalorder %s122, %s125
      %p131 = scmp.eq.s32.totalorder %s23, 0
      %p132 = por %p130, %p131
      %p133 = scmp.ne.s32.totalorder %s122, %s125
      %p134 = scmp.eq.s32.totalorder %s28, 1
      %p135 = por %p133, %p134
      %p136 = scmp.ne.s32.totalorder %s125, %s126
      %p137 = scmp.eq.s32.totalorder %s28, 0
      %p138 = por %p136, %p137
      %p139 = scmp.ne.s32.totalorder %s125, %s126
      %p140 = scmp.eq.s32.totalorder %s29, 1
      %p141 = por %p139, %p140
      %p143 = scmp.ne.s32.totalorder %s126, %s142
      %p144 = scmp.eq.s32.totalorder %s29, 0
      %p145 = por %p143, %p144
      %s146 = ssub.s32 %s23, %s30
      %p147 = scmp.eq.s32.totalorder %s146, 0
      %s149 = sadd.s32 %s148, 1
      %s150 = scalar_select %p147, %s148, %s149
      %p153 = pneg %p147
      %p154 = scmp.eq.s32.totalorder %s23, 1
      %p155 = por %p153, %p154
      %p156 = scmp.ne.s32.totalorder %s148, %s151
      %p157 = scmp.eq.s32.totalorder %s23, 0
      %p158 = por %p156, %p157
      %p159 = scmp.ne.s32.totalorder %s148, %s151
      %p160 = scmp.eq.s32.totalorder %s28, 1
      %p161 = por %p159, %p160
      %p162 = scmp.ne.s32.totalorder %s151, %s152
      %p163 = scmp.eq.s32.totalorder %s28, 0
      %p164 = por %p162, %p163
      %p165 = scmp.ne.s32.totalorder %s151, %s152
      %p166 = scmp.eq.s32.totalorder %s29, 1
      %p167 = por %p165, %p166
      %p169 = scmp.ne.s32.totalorder %s152, %s168
      %p170 = scmp.eq.s32.totalorder %s29, 0
      %p171 = por %p169, %p170
      %s172 = ssub.s32 %s23, %s30
      %p173 = scmp.eq.s32.totalorder %s172, 0
      %s175 = sadd.s32 %s174, 1
      %s176 = scalar_select %p173, %s174, %s175
      %p179 = pneg %p173
      %p180 = scmp.eq.s32.totalorder %s23, 1
      %p181 = por %p179, %p180
      %p182 = scmp.ne.s32.totalorder %s174, %s177
      %p183 = scmp.eq.s32.totalorder %s23, 0
      %p184 = por %p182, %p183
      %p185 = scmp.ne.s32.totalorder %s174, %s177
      %p186 = scmp.eq.s32.totalorder %s28, 1
      %p187 = por %p185, %p186
      %p188 = scmp.ne.s32.totalorder %s177, %s178
      %p189 = scmp.eq.s32.totalorder %s28, 0
      %p190 = por %p188, %p189
      %p191 = scmp.ne.s32.totalorder %s177, %s178
      %p192 = scmp.eq.s32.totalorder %s29, 1
      %p193 = por %p191, %p192
      %p195 = scmp.ne.s32.totalorder %s178, %s194
      %p196 = scmp.eq.s32.totalorder %s29, 0
      %p197 = por %p195, %p196
      %p198 = scmp.le.s32.totalorder 1, %s23
      %p199 = scmp.lt.s32.totalorder %s23, 3
      %p200 = pnand %p198, %p199
      %p201 = pneg %p200
      // Predicated region
      $region9: #{tpu_custom_call.1} parent=5 // pred_check
        _
      $region10: #{tpu_custom_call.1} parent=5 // pred_check_branch
        %203 = sbr.rel (%p200) target = $region12
      $region11: #{tpu_custom_call.1} parent=5 // pred_region
        %s204 = ssub.s32 %s23, 1
        // Predicated region
        $region13: #{tpu_custom_call.1} parent=11 // pred_check
          %p205 = pneg %p70
        $region14: #{tpu_custom_call.1} parent=11 // pred_check_branch
          %207 = sbr.rel (%p205) target = $region16
        $region15: #{tpu_custom_call.1} parent=11 // pred_region
          %209 = vsyncadd [#allocation6], 0
          %s210 = sshll.u32 %s1, 4
          %s211 = int_to_ptr.hbm [resolvable:$true] %s210
          %s212 = sshll.u32 [#allocation5], 4
          %s213 = int_to_ptr.vmem [resolvable:$true] %s212
          %218 = dma.hbm_to_vmem [thread:$0]  %s211, 2048, %s213, [#allocation6], 128, 128, 8
        $region16: #{tpu_custom_call.1} parent=11 // pred_fallthru
          _
        // Predicated region
        $region17: #{tpu_custom_call.1} parent=11 // pred_check
          %p219 = pneg %p91
        $region18: #{tpu_custom_call.1} parent=11 // pred_check_branch
          %221 = sbr.rel (%p219) target = $region20
        $region19: #{tpu_custom_call.1} parent=11 // pred_region
          _
        $region20: #{tpu_custom_call.1} parent=11 // pred_fallthru
          _
        // Predicated region
        $region21: #{tpu_custom_call.1} parent=11 // pred_check
          %p222 = pneg %p112
        $region22: #{tpu_custom_call.1} parent=11 // pred_check_branch
          %224 = sbr.rel (%p222) target = $region24
        $region23: #{tpu_custom_call.1} parent=11 // pred_region
          _
        $region24: #{tpu_custom_call.1} parent=11 // pred_fallthru
          _
      $region12: #{tpu_custom_call.1} parent=5 // pred_fallthru
        _
      %p225 = scmp.lt.s32.totalorder %s23, 2
      // Predicated region
      $region25: #{tpu_custom_call.1} parent=5 // pred_check
        %p226 = pneg %p225
      $region26: #{tpu_custom_call.1} parent=5 // pred_check_branch
        %228 = sbr.rel (%p226) target = $region28
      $region27: #{tpu_custom_call.1} parent=5 // pred_region
        // Predicated region
        $region29: #{tpu_custom_call.1} parent=27 // pred_check
          %p229 = pneg %p43
        $region30: #{tpu_custom_call.1} parent=27 // pred_check_branch
          %231 = sbr.rel (%p229) target = $region32
        $region31: #{tpu_custom_call.1} parent=27 // pred_region
          %s232 = sand.u32 %s33, 1
          %s233 = scalar_lea.sflag [#allocation3], %s232
          %s234 = sand.u32 %s33, 1
          %s235 = smul.addr %s234, 128
          %s236 = scalar_lea.vmem [#allocation2], %s235
          %s237 = smul.u32 16, %s23
          %239 = vsyncadd %s233, 0
          %s240 = smul.addr %s237, 8
          %s241 = scalar_lea.hbm %s0, %s240
          %s242 = sshll.u32 %s241, 4
          %s243 = int_to_ptr.hbm [resolvable:$true] %s242
          %s244 = sshll.u32 %s236, 4
          %s245 = int_to_ptr.vmem [resolvable:$true] %s244
          %250 = dma.hbm_to_vmem [thread:$0]  %s243, 2048, %s245, %s233, 128, 128, 8
        $region32: #{tpu_custom_call.1} parent=27 // pred_fallthru
          _
      $region28: #{tpu_custom_call.1} parent=5 // pred_fallthru
        _
      %p251 = scmp.le.s32.totalorder 1, %s23
      %p252 = scmp.lt.s32.totalorder %s23, 3
      %p253 = pnand %p251, %p252
      %p254 = pneg %p253
      // Predicated region
      $region33: #{tpu_custom_call.1} parent=5 // pred_check
        _
      $region34: #{tpu_custom_call.1} parent=5 // pred_check_branch
        %256 = sbr.rel (%p253) target = $region36
      $region35: #{tpu_custom_call.1} parent=5 // pred_region
        %s257 = ssub.s32 %s23, 1
        %s258 = sand.u32 %s36, 1
        %s259 = scalar_lea.sflag [#allocation3], %s258
        %s260 = sand.u32 %s36, 1
        %s261 = smul.addr %s260, 128
        %s262 = scalar_lea.vmem [#allocation2], %s261
        // Predicated region
        $region37: #{tpu_custom_call.1} parent=35 // pred_check
          %p263 = pneg %p49
        $region38: #{tpu_custom_call.1} parent=35 // pred_check_branch
          %265 = sbr.rel (%p263) target = $region40
        $region39: #{tpu_custom_call.1} parent=35 // pred_region
          %267 = dma.done %s259, 2048
        $region40: #{tpu_custom_call.1} parent=35 // pred_fallthru
          _
        // Predicated region
        $region41: #{tpu_custom_call.1} parent=35 // pred_check
          %p268 = pneg %p70
        $region42: #{tpu_custom_call.1} parent=35 // pred_check_branch
          %270 = sbr.rel (%p268) target = $region44
        $region43: #{tpu_custom_call.1} parent=35 // pred_region
          %272 = dma.done [#allocation6], 2048
        $region44: #{tpu_custom_call.1} parent=35 // pred_fallthru
          _
        %s273 = sand.u32 %s36, 1
        %s274 = scalar_lea.sflag [#allocation3], %s273
        %s275 = sand.u32 %s36, 1
        %s276 = smul.addr %s275, 128
        %s277 = scalar_lea.vmem [#allocation2], %s276
        %p278 = pneg %p49
        %p279 = pneg %p46
        %p280 = pneg %p70
        %p281 = pneg %p67
        %p282 = pneg %p91
        %p283 = pneg %p88
        %p284 = pneg %p112
        %p285 = pneg %p109
        %p286 = pneg %p138
        %p287 = pneg %p135
        %s288 = sand.u32 %s125, 1
        %s289 = scalar_lea.sflag [#allocation4], %s288
        %s290 = sand.u32 %s125, 1
        %s291 = smul.addr %s290, 128
        %s292 = scalar_lea.vmem [#allocation7], %s291
        %p293 = pneg %p164
        %p294 = pneg %p161
        %s295 = sand.u32 %s151, 1
        %s296 = scalar_lea.sflag [#allocation9], %s295
        %s297 = sand.u32 %s151, 1
        %s298 = scalar_lea.vmem [#allocation8], %s297
        %p299 = pneg %p190
        %p300 = pneg %p187
        %s301 = smul.u32 16, %s28
        %p302 = scmp.lt.s32.totalorder %s301, 31
        %s303 = scalar_select %p302, %s301, 31
        %s304 = smul.addr %s303, 8
        %s305 = scalar_lea.vmem %s6, %s304
        %s306 = smul.u32 16, %s28
        %s307 = smul.u32 16, %s28
        %s308 = smul.u32 16, %s28
        %p309 = scmp.lt.s32.totalorder %s308, 31
        %s310 = scalar_select %p309, %s308, 31
        %s311 = smul.addr %s310, 8
        %s312 = scalar_lea.vmem %s6, %s311
        %s313 = smul.u32 16, %s28
        %v314 = vld [vmem:[%s262] sm:$0xff]
        %v315 = vld [vmem:[%s262 + $0x8] sm:$0xff]
        %v316 = vld [vmem:[%s262 + $0x10] sm:$0xff]
        %v317 = vld [vmem:[%s262 + $0x18] sm:$0xff]
        %v318 = vld [vmem:[%s262 + $0x20] sm:$0xff]
        %v319 = vld [vmem:[%s262 + $0x28] sm:$0xff]
        %v320 = vld [vmem:[%s262 + $0x30] sm:$0xff]
        %v321 = vld [vmem:[%s262 + $0x38] sm:$0xff]
        %v322 = vld [vmem:[%s262 + $0x40] sm:$0xff]
        %v323 = vld [vmem:[%s262 + $0x48] sm:$0xff]
        %v324 = vld [vmem:[%s262 + $0x50] sm:$0xff]
        %v325 = vld [vmem:[%s262 + $0x58] sm:$0xff]
        %v326 = vld [vmem:[%s262 + $0x60] sm:$0xff]
        %v327 = vld [vmem:[%s262 + $0x68] sm:$0xff]
        %v328 = vld [vmem:[%s262 + $0x70] sm:$0xff]
        %v329 = vld [vmem:[%s262 + $0x78] sm:$0xff]
        %v330 = vpack.c.bf16 %v315, %v314
        %v331 = vpack.c.bf16 %v317, %v316
        %v332 = vpack.c.bf16 %v319, %v318
        %v333 = vpack.c.bf16 %v321, %v320
        %v334 = vpack.c.bf16 %v323, %v322
        %v335 = vpack.c.bf16 %v325, %v324
        %v336 = vpack.c.bf16 %v327, %v326
        %v337 = vpack.c.bf16 %v329, %v328
        %v338 = vld [vmem:[#allocation5] sm:$0xff]
        %v339 = vld [vmem:[#allocation5 + $0x8] sm:$0xff]
        %v340 = vld [vmem:[#allocation5 + $0x10] sm:$0xff]
        %v341 = vld [vmem:[#allocation5 + $0x18] sm:$0xff]
        %v342 = vld [vmem:[#allocation5 + $0x20] sm:$0xff]
        %v343 = vld [vmem:[#allocation5 + $0x28] sm:$0xff]
        %v344 = vld [vmem:[#allocation5 + $0x30] sm:$0xff]
        %v345 = vld [vmem:[#allocation5 + $0x38] sm:$0xff]
        %v346 = vld [vmem:[#allocation5 + $0x40] sm:$0xff]
        %v347 = vld [vmem:[#allocation5 + $0x48] sm:$0xff]
        %v348 = vld [vmem:[#allocation5 + $0x50] sm:$0xff]
        %v349 = vld [vmem:[#allocation5 + $0x58] sm:$0xff]
        %v350 = vld [vmem:[#allocation5 + $0x60] sm:$0xff]
        %v351 = vld [vmem:[#allocation5 + $0x68] sm:$0xff]
        %v352 = vld [vmem:[#allocation5 + $0x70] sm:$0xff]
        %v353 = vld [vmem:[#allocation5 + $0x78] sm:$0xff]
        %v354 = vpack.c.bf16 %v339, %v338
        %v355 = vpack.c.bf16 %v341, %v340
        %v356 = vpack.c.bf16 %v343, %v342
        %v357 = vpack.c.bf16 %v345, %v344
        %v358 = vpack.c.bf16 %v347, %v346
        %v359 = vpack.c.bf16 %v349, %v348
        %v360 = vpack.c.bf16 %v351, %v350
        %v361 = vpack.c.bf16 %v353, %v352
        %362 = vmatpush.bf16.msra.mxu0 %v361
        %363 = vmatpush.bf16.msra.mxu0 %v360
        %364 = vmatpush.bf16.msra.mxu0 %v359
        %365 = vmatpush.bf16.msra.mxu0 %v358
        %366 = vmatpush.bf16.msra.mxu0 %v357
        %367 = vmatpush.bf16.msra.mxu0 %v356
        %368 = vmatpush.bf16.msra.mxu0 %v355
        %369 = vmatpush.bf16.msra.mxu0 %v354
        %370 = vmatmul.bf16.gmra.mxu0 %v330
        %v371 = vpop.f32.mrf.mxu0
        %v372 = vadd.f32 0.0, %v371
        %v373 = vpop.f32.mrf.mxu0
        %v374 = vadd.f32 0.0, %v373
        %375 = vmatmul.bf16.gmra.mxu0 %v331
        %v376 = vpop.f32.mrf.mxu0
        %v377 = vadd.f32 0.0, %v376
        %v378 = vpop.f32.mrf.mxu0
        %v379 = vadd.f32 0.0, %v378
        %380 = vmatmul.bf16.gmra.mxu0 %v332
        %v381 = vpop.f32.mrf.mxu0
        %v382 = vadd.f32 0.0, %v381
        %v383 = vpop.f32.mrf.mxu0
        %v384 = vadd.f32 0.0, %v383
        %385 = vmatmul.bf16.gmra.mxu0 %v333
        %v386 = vpop.f32.mrf.mxu0
        %v387 = vadd.f32 0.0, %v386
        %v388 = vpop.f32.mrf.mxu0
        %v389 = vadd.f32 0.0, %v388
        %390 = vmatmul.bf16.gmra.mxu0 %v334
        %v391 = vpop.f32.mrf.mxu0
        %v392 = vadd.f32 0.0, %v391
        %v393 = vpop.f32.mrf.mxu0
        %v394 = vadd.f32 0.0, %v393
        %395 = vmatmul.bf16.gmra.mxu0 %v335
        %v396 = vpop.f32.mrf.mxu0
        %v397 = vadd.f32 0.0, %v396
        %v398 = vpop.f32.mrf.mxu0
        %v399 = vadd.f32 0.0, %v398
        %400 = vmatmul.bf16.gmra.mxu0 %v336
        %v401 = vpop.f32.mrf.mxu0
        %v402 = vadd.f32 0.0, %v401
        %v403 = vpop.f32.mrf.mxu0
        %v404 = vadd.f32 0.0, %v403
        %405 = vmatmul.bf16.gmra.mxu0 %v337
        %v406 = vpop.f32.mrf.mxu0
        %v407 = vadd.f32 0.0, %v406
        %v408 = vpop.f32.mrf.mxu0
        %v409 = vadd.f32 0.0, %v408
        %410 = vdwg.mxu0
        %411 = vst [vmem:[%s292] sm:$0xff] %v372
        %412 = vst [vmem:[%s292 + $0x8] sm:$0xff] %v374
        %413 = vst [vmem:[%s292 + $0x10] sm:$0xff] %v377
        %414 = vst [vmem:[%s292 + $0x18] sm:$0xff] %v379
        %415 = vst [vmem:[%s292 + $0x20] sm:$0xff] %v382
        %416 = vst [vmem:[%s292 + $0x28] sm:$0xff] %v384
        %417 = vst [vmem:[%s292 + $0x30] sm:$0xff] %v387
        %418 = vst [vmem:[%s292 + $0x38] sm:$0xff] %v389
        %419 = vst [vmem:[%s292 + $0x40] sm:$0xff] %v392
        %420 = vst [vmem:[%s292 + $0x48] sm:$0xff] %v394
        %421 = vst [vmem:[%s292 + $0x50] sm:$0xff] %v397
        %422 = vst [vmem:[%s292 + $0x58] sm:$0xff] %v399
        %423 = vst [vmem:[%s292 + $0x60] sm:$0xff] %v402
        %424 = vst [vmem:[%s292 + $0x68] sm:$0xff] %v404
        %425 = vst [vmem:[%s292 + $0x70] sm:$0xff] %v407
        %426 = vst [vmem:[%s292 + $0x78] sm:$0xff] %v409
        %v427 = vld [vmem:[%s3] sm:$0x1]
        %v429 = vperm.slane %v427, 0
        %v431 = vmul.f32 %v372, %v429
        %v432 = vmul.f32 %v374, %v429
        %v433 = vmul.f32 %v377, %v429
        %v434 = vmul.f32 %v379, %v429
        %v435 = vmul.f32 %v382, %v429
        %v436 = vmul.f32 %v384, %v429
        %v437 = vmul.f32 %v387, %v429
        %v438 = vmul.f32 %v389, %v429
        %v439 = vmul.f32 %v392, %v429
        %v440 = vmul.f32 %v394, %v429
        %v441 = vmul.f32 %v397, %v429
        %v442 = vmul.f32 %v399, %v429
        %v443 = vmul.f32 %v402, %v429
        %v444 = vmul.f32 %v404, %v429
        %v445 = vmul.f32 %v407, %v429
        %v446 = vmul.f32 %v409, %v429
        %447 = vadd.xlane.f32.xlu0 %v431
        %v448 = vpop.xlane.xlu0 %447
        %449 = vadd.xlane.f32.xlu0 %v432
        %v450 = vpop.xlane.xlu0 %449
        %451 = vadd.xlane.f32.xlu0 %v433
        %v452 = vpop.xlane.xlu0 %451
        %453 = vadd.xlane.f32.xlu0 %v434
        %v454 = vpop.xlane.xlu0 %453
        %455 = vadd.xlane.f32.xlu0 %v435
        %v456 = vpop.xlane.xlu0 %455
        %457 = vadd.xlane.f32.xlu0 %v436
        %v458 = vpop.xlane.xlu0 %457
        %459 = vadd.xlane.f32.xlu0 %v437
        %v460 = vpop.xlane.xlu0 %459
        %461 = vadd.xlane.f32.xlu0 %v438
        %v462 = vpop.xlane.xlu0 %461
        %463 = vadd.xlane.f32.xlu0 %v439
        %v464 = vpop.xlane.xlu0 %463
        %465 = vadd.xlane.f32.xlu0 %v440
        %v466 = vpop.xlane.xlu0 %465
        %467 = vadd.xlane.f32.xlu0 %v441
        %v468 = vpop.xlane.xlu0 %467
        %469 = vadd.xlane.f32.xlu0 %v442
        %v470 = vpop.xlane.xlu0 %469
        %471 = vadd.xlane.f32.xlu0 %v443
        %v472 = vpop.xlane.xlu0 %471
        %473 = vadd.xlane.f32.xlu0 %v444
        %v474 = vpop.xlane.xlu0 %473
        %475 = vadd.xlane.f32.xlu0 %v445
        %v476 = vpop.xlane.xlu0 %475
        %477 = vadd.xlane.f32.xlu0 %v446
        %v478 = vpop.xlane.xlu0 %477
        %vm479 = vcmask 7168
        %480 = vst.msk [vmem:[%s312] sm:$0xff] %vm479, %v448
        %481 = vst.msk [vmem:[%s312 + $0x8] sm:$0xff] %vm479, %v450
        %482 = vst.msk [vmem:[%s312 + $0x10] sm:$0xff] %vm479, %v452
        %483 = vst.msk [vmem:[%s312 + $0x18] sm:$0xff] %vm479, %v454
        %484 = vst.msk [vmem:[%s312 + $0x20] sm:$0xff] %vm479, %v456
        %485 = vst.msk [vmem:[%s312 + $0x28] sm:$0xff] %vm479, %v458
        %486 = vst.msk [vmem:[%s312 + $0x30] sm:$0xff] %vm479, %v460
        %487 = vst.msk [vmem:[%s312 + $0x38] sm:$0xff] %vm479, %v462
        %488 = vst.msk [vmem:[%s312 + $0x40] sm:$0xff] %vm479, %v464
        %489 = vst.msk [vmem:[%s312 + $0x48] sm:$0xff] %vm479, %v466
        %490 = vst.msk [vmem:[%s312 + $0x50] sm:$0xff] %vm479, %v468
        %491 = vst.msk [vmem:[%s312 + $0x58] sm:$0xff] %vm479, %v470
        %492 = vst.msk [vmem:[%s312 + $0x60] sm:$0xff] %vm479, %v472
        %493 = vst.msk [vmem:[%s312 + $0x68] sm:$0xff] %vm479, %v474
        %494 = vst.msk [vmem:[%s312 + $0x70] sm:$0xff] %vm479, %v476
        %495 = vst.msk [vmem:[%s312 + $0x78] sm:$0xff] %vm479, %v478
        %v496 = vld [vmem:[%s2] sm:$0x1]
        %497 = vmatpush.xpose.msra.mxu0 %v409
        %498 = vmatpush.xpose.msra.mxu0 %v407
        %499 = vmatpush.xpose.msra.mxu0 %v404
        %500 = vmatpush.xpose.msra.mxu0 %v402
        %501 = vmatpush.xpose.msra.mxu0 %v399
        %502 = vmatpush.xpose.msra.mxu0 %v397
        %503 = vmatpush.xpose.msra.mxu0 %v394
        %504 = vmatpush.xpose.msra.mxu0 %v392
        %505 = vmatpush.xpose.msra.mxu0 %v389
        %506 = vmatpush.xpose.msra.mxu0 %v387
        %507 = vmatpush.xpose.msra.mxu0 %v384
        %508 = vmatpush.xpose.msra.mxu0 %v382
        %509 = vmatpush.xpose.msra.mxu0 %v379
        %510 = vmatpush.xpose.msra.mxu0 %v377
        %511 = vmatpush.xpose.msra.mxu0 %v374
        %512 = vmatpush.xpose.msra.mxu0 %v372
        %513 = vmatmul.f32.gmra.mxu0 %v496
        %v514 = vpop.f32.mrf.mxu0
        %v515 = vadd.f32 0.0, %v514
        %516 = vdwg.mxu0
        %517 = vst [vmem:[%s298] sm:$0x1] %v515
        %s518 = sand.u32 %s125, 1
        %s519 = scalar_lea.sflag [#allocation4], %s518
        %s520 = sand.u32 %s125, 1
        %s521 = smul.addr %s520, 128
        %s522 = scalar_lea.vmem [#allocation7], %s521
        %s523 = sand.u32 %s151, 1
        %s524 = scalar_lea.sflag [#allocation9], %s523
        %s525 = sand.u32 %s151, 1
        %s526 = scalar_lea.vmem [#allocation8], %s525
        %s527 = smul.u32 16, %s28
        %p528 = scmp.lt.s32.totalorder %s527, 31
        %s529 = scalar_select %p528, %s527, 31
        %s530 = smul.addr %s529, 8
        %s531 = scalar_lea.vmem %s6, %s530
        // Predicated region
        $region45: #{tpu_custom_call.1} parent=35 // pred_check
          %p532 = pneg %p135
        $region46: #{tpu_custom_call.1} parent=35 // pred_check_branch
          %534 = sbr.rel (%p532) target = $region48
        $region47: #{tpu_custom_call.1} parent=35 // pred_region
          %s535 = smul.u32 16, %s28
          %537 = vsyncadd %s519, 0
          %s538 = smul.addr %s535, 8
          %s539 = scalar_lea.hbm %s4, %s538
          %s540 = sshll.u32 %s522, 4
          %s541 = int_to_ptr.vmem [resolvable:$true] %s540
          %s542 = sshll.u32 %s539, 4
          %s543 = int_to_ptr.hbm [resolvable:$true] %s542
          %548 = dma.vmem_to_hbm [thread:$0]  %s541, 2048, %s543, %s519, 128, 128, 8
        $region48: #{tpu_custom_call.1} parent=35 // pred_fallthru
          _
        // Predicated region
        $region49: #{tpu_custom_call.1} parent=35 // pred_check
          %p549 = pneg %p161
        $region50: #{tpu_custom_call.1} parent=35 // pred_check_branch
          %551 = sbr.rel (%p549) target = $region52
        $region51: #{tpu_custom_call.1} parent=35 // pred_region
          %553 = vsyncadd %s524, 0
          %s554 = scalar_lea.hbm %s5, %s28
          %s556 = sshll.u32 %s526, 4
          %s557 = int_to_ptr.vmem [resolvable:$true] %s556
          %s558 = sshll.u32 %s554, 4
          %s559 = int_to_ptr.hbm [resolvable:$true] %s558
          %561 = dma.vmem_to_hbm [thread:$0]  %s557, 16, %s559, %s524
        $region52: #{tpu_custom_call.1} parent=35 // pred_fallthru
          _
        // Predicated region
        $region53: #{tpu_custom_call.1} parent=35 // pred_check
          %p562 = pneg %p187
        $region54: #{tpu_custom_call.1} parent=35 // pred_check_branch
          %564 = sbr.rel (%p562) target = $region56
        $region55: #{tpu_custom_call.1} parent=35 // pred_region
          %s565 = smul.u32 16, %s28
        $region56: #{tpu_custom_call.1} parent=35 // pred_fallthru
          _
      $region36: #{tpu_custom_call.1} parent=5 // pred_fallthru
        _
      %p566 = scmp.le.s32.totalorder 2, %s23
      // Predicated region
      $region57: #{tpu_custom_call.1} parent=5 // pred_check
        %p567 = pneg %p566
      $region58: #{tpu_custom_call.1} parent=5 // pred_check_branch
        %569 = sbr.rel (%p567) target = $region60
      $region59: #{tpu_custom_call.1} parent=5 // pred_region
        %s570 = ssub.s32 %s23, 2
        // Predicated region
        $region61: #{tpu_custom_call.1} parent=59 // pred_check
          %p571 = pneg %p141
        $region62: #{tpu_custom_call.1} parent=59 // pred_check_branch
          %573 = sbr.rel (%p571) target = $region64
        $region63: #{tpu_custom_call.1} parent=59 // pred_region
          %s574 = sand.u32 %s126, 1
          %s575 = scalar_lea.sflag [#allocation4], %s574
          %s576 = sand.u32 %s126, 1
          %s577 = smul.addr %s576, 128
          %s578 = scalar_lea.vmem [#allocation7], %s577
          %580 = dma.done %s575, 2048
        $region64: #{tpu_custom_call.1} parent=59 // pred_fallthru
          _
        // Predicated region
        $region65: #{tpu_custom_call.1} parent=59 // pred_check
          %p581 = pneg %p167
        $region66: #{tpu_custom_call.1} parent=59 // pred_check_branch
          %583 = sbr.rel (%p581) target = $region68
        $region67: #{tpu_custom_call.1} parent=59 // pred_region
          %s584 = sand.u32 %s152, 1
          %s585 = scalar_lea.sflag [#allocation9], %s584
          %s586 = sand.u32 %s152, 1
          %s587 = scalar_lea.vmem [#allocation8], %s586
          %589 = dma.done %s585, 16
        $region68: #{tpu_custom_call.1} parent=59 // pred_fallthru
          _
        // Predicated region
        $region69: #{tpu_custom_call.1} parent=59 // pred_check
          %p590 = pneg %p193
        $region70: #{tpu_custom_call.1} parent=59 // pred_check_branch
          %592 = sbr.rel (%p590) target = $region72
        $region71: #{tpu_custom_call.1} parent=59 // pred_region
          %s593 = smul.u32 16, %s29
          %p594 = scmp.lt.s32.totalorder %s593, 31
          %s595 = scalar_select %p594, %s593, 31
          %s596 = smul.addr %s595, 8
          %s597 = scalar_lea.vmem %s6, %s596
        $region72: #{tpu_custom_call.1} parent=59 // pred_fallthru
          _
      $region60: #{tpu_custom_call.1} parent=5 // pred_fallthru
        _
    $region6: #{tpu_custom_call.1} parent=1 // loop_footer
      %s27 = sadd.s32 1, %s23
    $region7: #{tpu_custom_call.1} parent=1 // loop_footer_branch
      %22 = sbr.rel target = $region3
    $region8: #{tpu_custom_call.1} parent=1 // loop_exit
      _
    %598 = vsyncpa [#allocation3], 1
    %s599 = scalar_lea.sflag [#allocation3], 1
    %600 = vsyncpa %s599, 1
    %601 = vsyncpa [#allocation6], 1
    %602 = vsyncpa [#allocation4], 1
    %s603 = scalar_lea.sflag [#allocation4], 1
    %604 = vsyncpa %s603, 1
    %605 = vsyncpa [#allocation9], 1
    %s606 = scalar_lea.sflag [#allocation9], 1
    %607 = vsyncpa %s606, 1

</llo_original>
